<compile_context>
chip_gen: v5e
topology: v5e:2x2
jax: 0.10.0
libtpu: 0.0.40
codegen_flags: <defaults>
</compile_context>

<pallas_src>
import functools

import jax
import jax.numpy as jnp
import numpy as np
from jax.experimental import pallas as pl
from jax.experimental.pallas import tpu as pltpu


def _final_layer_kernel(x_ref, shift_ref, ops_ref, w2t_ref, b2_ref, o_ref,
                        *, out_width):
    # x_ref:     (1, TILE_N, H)     token tile
    # shift_ref: (1, 1, H)          per-batch shift
    # ops_ref:   (1, 1, H)          per-batch (1 + scale)
    # w2t_ref:   (H, OUT_P)         W_final^T, lane-padded (resident)
    # b2_ref:    (1, OUT_P)         b_final, lane-padded  (resident)
    # o_ref:     (1, TILE_N, out_width)

    # --- LayerNorm (no affine, eps=1e-5): stats in f32, d reused (no CSE reliance) ---
    x = x_ref[0].astype(jnp.float32)                      # (TILE_N, H)
    mu = jnp.mean(x, axis=-1, keepdims=True)
    d = x - mu
    var = jnp.mean(d * d, axis=-1, keepdims=True)
    rstd = jax.lax.rsqrt(var + 1e-5)

    # --- modulate folded with the LN scale: (x - mu) * (rstd * (1+scale)) + shift ---
    mult = rstd * ops_ref[0].astype(jnp.float32)          # (TILE_N, H)
    xm = d * mult + shift_ref[0].astype(jnp.float32)      # (TILE_N, H), f32

    # --- final projection on the MXU (operands in w2t dtype, f32 accumulation) ---
    out = jnp.dot(xm.astype(w2t_ref.dtype), w2t_ref[...],
                  preferred_element_type=jnp.float32) + b2_ref[...]

    if out_width == out.shape[-1]:
        o_ref[0] = out.astype(o_ref.dtype)
    else:
        # Unpadded store: slice off the matmul lane padding before writing HBM.
        o_ref[0] = out[:, :out_width].astype(o_ref.dtype)


def _pick_tile_n(n, cap, granule, batch):
    """Token tile: multiple of `granule`, <= cap, dividing n if possible."""
    cap = max(granule, (cap // granule) * granule)
    if n <= cap:
        tile = n                       # full extent is always a legal block
    else:
        tile = 0
        t = cap
        while t >= granule:
            if n % t == 0:
                tile = t
                break
            t -= granule
        if tile == 0:
            tile = cap                 # no clean divisor: wrapper pads N up
    # Megacore balance (v7x has 2 TCs): avoid a single-step grid when B == 1.
    if batch == 1 and -(-n // tile) < 2 and n > granule:
        tile = max(granule, ((tile // 2) // granule) * granule)
    return tile


def final_layer(x, c, w_dense, b_dense, w_final, b_final,
                *, tile_n=1024, compute_dtype=None, out_dtype=None,
                pad_output=False):
    """x: [B, N, H], c: [B, H]. Weights in PyTorch Linear convention:
    w_dense [2H, H], b_dense [2H], w_final [OUT, H], b_final [OUT].

    compute_dtype: dtype of the projection-matmul operands (defaults to bf16
    when x is f32; LN stats and accumulation always f32).
    pad_output=True keeps the lane-dense (B, N, OUT_P) padded output (useful on
    v5e where masked stores are relatively pricier; consumer slices/fuses)."""
    B, N, H = x.shape
    OUT = w_final.shape[0]
    OUT_P = -(-OUT // 128) * 128                      # lane-dense matmul width
    out_dt = out_dtype if out_dtype is not None else x.dtype

    if compute_dtype is not None:
        cd = compute_dtype
    elif x.dtype == jnp.float32:
        cd = jnp.bfloat16                             # MXU-native on v5e/v6e/v7x
    else:
        cd = x.dtype

    granule = 16 if jnp.dtype(x.dtype).itemsize == 2 else 8
    TILE_N = _pick_tile_n(N, tile_n, granule, B)
    num_n = -(-N // TILE_N)
    N_PAD = num_n * TILE_N

    # --- conditioning path (tiny B x H work) hoisted out of the kernel ---
    c32 = c.astype(jnp.float32)
    cs = c32 * jax.nn.sigmoid(c32)                                   # SiLU
    mod = cs @ w_dense.astype(jnp.float32).T + b_dense.astype(jnp.float32)
    shift = mod[:, :H].reshape(B, 1, H)                              # (B, 1, H)
    one_plus_scale = (1.0 + mod[:, H:]).reshape(B, 1, H)             # (B, 1, H)

    # --- weight prep: transpose, cast, lane-pad OUT -> OUT_P (resident in VMEM) ---
    w2t = jnp.asarray(w_final).T.astype(cd)                          # (H, OUT)
    w2t = jnp.pad(w2t, ((0, 0), (0, OUT_P - OUT)))                   # (H, OUT_P)
    b2 = jnp.pad(jnp.asarray(b_final).astype(jnp.float32),
                 (0, OUT_P - OUT)).reshape(1, OUT_P)                 # (1, OUT_P)

    x_in = x if N_PAD == N else jnp.pad(x, ((0, 0), (0, N_PAD - N), (0, 0)))

    out_w = OUT_P if pad_output else OUT
    kernel = functools.partial(_final_layer_kernel, out_width=out_w)

    isz = lambda dt: jnp.dtype(dt).itemsize
    cost = pl.CostEstimate(
        flops=2 * B * N_PAD * H * OUT_P,
        transcendentals=B * N_PAD,                     # one rsqrt per token
        bytes_accessed=(B * N_PAD * H * isz(x.dtype)
                        + B * N_PAD * out_w * isz(out_dt)
                        + H * OUT_P * isz(cd) + OUT_P * 4
                        + 2 * B * H * 4),
    )

    out = pl.pallas_call(
        kernel,
        out_shape=jax.ShapeDtypeStruct((B, N_PAD, out_w), out_dt),
        grid_spec=pltpu.PrefetchScalarGridSpec(
            num_scalar_prefetch=0,
            grid=(B, num_n),
            in_specs=[
                pl.BlockSpec((1, TILE_N, H), lambda b, n: (b, n, 0)),   # x tile
                pl.BlockSpec((1, 1, H), lambda b, n: (b, 0, 0)),        # shift
                pl.BlockSpec((1, 1, H), lambda b, n: (b, 0, 0)),        # 1 + scale
                pl.BlockSpec((H, OUT_P), lambda b, n: (0, 0)),          # W_final^T (resident)
                pl.BlockSpec((1, OUT_P), lambda b, n: (0, 0)),          # b_final   (resident)
            ],
            out_specs=pl.BlockSpec((1, TILE_N, out_w), lambda b, n: (b, n, 0)),
        ),
        compiler_params=pltpu.CompilerParams(
            dimension_semantics=("parallel", "parallel"),   # no reduction axis
            vmem_limit_bytes=48 * 1024 * 1024,              # fits v7x 64 MiB physical
        ),
        cost_estimate=cost,
    )(x_in, shift, one_plus_scale, w2t, b2)

    if N_PAD != N:
        out = out[:, :N, :]
    return out


def final_layer_ref(x, c, w_dense, b_dense, w_final, b_final):
    """Pure-JAX reference for correctness checking."""
    H = x.shape[-1]
    cs = c * jax.nn.sigmoid(c)
    mod = cs @ w_dense.T + b_dense
    shift, scale = mod[:, :H], mod[:, H:]
    mu = jnp.mean(x, axis=-1, keepdims=True)
    var = jnp.mean((x - mu) ** 2, axis=-1, keepdims=True)
    xn = (x - mu) * jax.lax.rsqrt(var + 1e-5)
    xm = xn * (1 + scale[:, None, :]) + shift[:, None, :]
    return xm @ w_final.T + b_final


if __name__ == "__main__":
    jax.config.update("jax_default_matmul_precision", "highest")

    # Small shapes consistent with the module's forward.
    B, N, H = 2, 8, 32                  # batch, tokens, hidden_size
    patch_size, out_channels = 2, 4
    OUT = patch_size * patch_size * out_channels   # 16

    key = jax.random.PRNGKey(0)
    kx, kc, kw1, kb1, kw2, kb2 = jax.random.split(key, 6)

    x = jax.random.normal(kx, (B, N, H), dtype=jnp.float32)
    c = jax.random.normal(kc, (B, H), dtype=jnp.float32)

    # Module zero-inits these; use small random values so the kernel path is
    # non-trivial while staying deterministic.
    w_dense = 0.05 * jax.random.normal(kw1, (2 * H, H), dtype=jnp.float32)
    b_dense = 0.05 * jax.random.normal(kb1, (2 * H,), dtype=jnp.float32)
    w_final = 0.05 * jax.random.normal(kw2, (OUT, H), dtype=jnp.float32)
    b_final = 0.05 * jax.random.normal(kb2, (OUT,), dtype=jnp.float32)

    ref = np.asarray(final_layer_ref(x, c, w_dense, b_dense, w_final, b_final))

    # f32 matmul operands: tight tolerance.
    run_f32 = jax.jit(lambda x, c: final_layer(
        x, c, w_dense, b_dense, w_final, b_final, compute_dtype=jnp.float32))
    out_f32 = jax.block_until_ready(run_f32(x, c))
    np.testing.assert_allclose(np.asarray(out_f32), ref, rtol=1e-4, atol=1e-4)

    # Default path (bf16 matmul operands, f32 accumulation): looser tolerance.
    run_def = jax.jit(lambda x, c: final_layer(
        x, c, w_dense, b_dense, w_final, b_final))
    out_def = jax.block_until_ready(run_def(x, c))
    np.testing.assert_allclose(np.asarray(out_def), ref, rtol=2e-2, atol=2e-2)

    print("KERNEL_OK")
</pallas_src>

<mosaic_0001>
module attributes {stable_mosaic.version = 11 : i64} {
  func.func @_final_layer_kernel(%arg0: i32, %arg1: i32, %arg2: memref<1x8x32xf32, #tpu.memory_space<vmem>>, %arg3: memref<1x1x32xf32, #tpu.memory_space<vmem>>, %arg4: memref<1x1x32xf32, #tpu.memory_space<vmem>>, %arg5: memref<32x128xf32, #tpu.memory_space<vmem>>, %arg6: memref<1x128xf32, #tpu.memory_space<vmem>>, %arg7: memref<1x8x16xf32, #tpu.memory_space<vmem>>) attributes {dimension_semantics = [#tpu.dimension_semantics<parallel>, #tpu.dimension_semantics<parallel>], iteration_bounds = array<i64: 2, 1>, scalar_prefetch = 0 : i64, scratch_operands = 0 : i64, tpu.core_type = #tpu.core_type<tc>, window_params = [{transform_indices = @transform_0, window_bounds = array<i64: 1, 8, 32>}, {transform_indices = @transform_1, window_bounds = array<i64: 1, 1, 32>}, {transform_indices = @transform_2, window_bounds = array<i64: 1, 1, 32>}, {pipeline_mode = #tpu.pipeline_mode<synchronous>, transform_indices = @transform_3, window_bounds = array<i64: 32, 128>}, {pipeline_mode = #tpu.pipeline_mode<synchronous>, transform_indices = @transform_4, window_bounds = array<i64: 1, 128>}, {transform_indices = @transform_5, window_bounds = array<i64: 1, 8, 16>}]} {
    %c0 = arith.constant 0 : index
    %c0_0 = arith.constant 0 : index
    %c0_1 = arith.constant 0 : index
    %0 = vector.load %arg2[%c0, %c0_0, %c0_1] : memref<1x8x32xf32, #tpu.memory_space<vmem>>, vector<1x8x32xf32>
    %1 = vector.shape_cast %0 : vector<1x8x32xf32> to vector<8x32xf32>
    %cst = arith.constant dense<0.000000e+00> : vector<8xf32>
    %2 = vector.multi_reduction <add>, %1, %cst [1] : vector<8x32xf32> to vector<8xf32>
    %3 = vector.shape_cast %2 : vector<8xf32> to vector<8x1xf32>
    %cst_2 = arith.constant 3.200000e+01 : f32
    %4 = vector.broadcast %cst_2 : f32 to vector<8x1xf32>
    %5 = arith.divf %3, %4 : vector<8x1xf32>
    %6 = vector.broadcast %5 : vector<8x1xf32> to vector<8x32xf32>
    %7 = arith.subf %1, %6 : vector<8x32xf32>
    %8 = arith.mulf %7, %7 : vector<8x32xf32>
    %cst_3 = arith.constant dense<0.000000e+00> : vector<8xf32>
    %9 = vector.multi_reduction <add>, %8, %cst_3 [1] : vector<8x32xf32> to vector<8xf32>
    %10 = vector.shape_cast %9 : vector<8xf32> to vector<8x1xf32>
    %cst_4 = arith.constant 3.200000e+01 : f32
    %11 = vector.broadcast %cst_4 : f32 to vector<8x1xf32>
    %12 = arith.divf %10, %11 : vector<8x1xf32>
    %cst_5 = arith.constant 9.99999974E-6 : f32
    %13 = vector.broadcast %cst_5 : f32 to vector<8x1xf32>
    %14 = arith.addf %12, %13 : vector<8x1xf32>
    %15 = math.rsqrt %14 : vector<8x1xf32>
    %c0_6 = arith.constant 0 : index
    %c0_7 = arith.constant 0 : index
    %c0_8 = arith.constant 0 : index
    %16 = vector.load %arg4[%c0_6, %c0_7, %c0_8] : memref<1x1x32xf32, #tpu.memory_space<vmem>>, vector<1x1x32xf32>
    %17 = vector.shape_cast %16 : vector<1x1x32xf32> to vector<1x32xf32>
    %18 = vector.broadcast %15 : vector<8x1xf32> to vector<8x32xf32>
    %19 = vector.broadcast %17 : vector<1x32xf32> to vector<8x32xf32>
    %20 = arith.mulf %18, %19 : vector<8x32xf32>
    %21 = arith.mulf %7, %20 : vector<8x32xf32>
    %c0_9 = arith.constant 0 : index
    %c0_10 = arith.constant 0 : index
    %c0_11 = arith.constant 0 : index
    %22 = vector.load %arg3[%c0_9, %c0_10, %c0_11] : memref<1x1x32xf32, #tpu.memory_space<vmem>>, vector<1x1x32xf32>
    %23 = vector.shape_cast %22 : vector<1x1x32xf32> to vector<1x32xf32>
    %24 = vector.broadcast %23 : vector<1x32xf32> to vector<8x32xf32>
    %25 = arith.addf %21, %24 : vector<8x32xf32>
    %c0_12 = arith.constant 0 : index
    %c0_13 = arith.constant 0 : index
    %26 = vector.load %arg5[%c0_12, %c0_13] : memref<32x128xf32, #tpu.memory_space<vmem>>, vector<32x128xf32>
    %cst_14 = arith.constant dense<0.000000e+00> : vector<8x128xf32>
    %27 = tpu.matmul %25, %26, %cst_14 {dimension_numbers = #tpu.dot_dimension_numbers<[1], [0], [0], [1], [0, 0, 1, 1], [], []>, precision = #tpu.contract_precision<fp32>} : vector<8x32xf32>, vector<32x128xf32>, vector<8x128xf32> -> vector<8x128xf32>
    %c0_15 = arith.constant 0 : index
    %c0_16 = arith.constant 0 : index
    %28 = vector.load %arg6[%c0_15, %c0_16] : memref<1x128xf32, #tpu.memory_space<vmem>>, vector<1x128xf32>
    %29 = vector.broadcast %28 : vector<1x128xf32> to vector<8x128xf32>
    %30 = arith.addf %27, %29 : vector<8x128xf32>
    %31 = vector.extract_strided_slice %30 {offsets = [0, 0], sizes = [8, 16], strides = [1, 1]} : vector<8x128xf32> to vector<8x16xf32>
    %c0_17 = arith.constant 0 : index
    %c0_18 = arith.constant 0 : index
    %c0_19 = arith.constant 0 : index
    %32 = vector.load %arg7[%c0_17, %c0_18, %c0_19] : memref<1x8x16xf32, #tpu.memory_space<vmem>>, vector<1x8x16xf32>
    %33 = vector.shape_cast %32 : vector<1x8x16xf32> to vector<8x16xf32>
    %34 = vector.shape_cast %31 : vector<8x16xf32> to vector<1x8x16xf32>
    tpu.vector_store %arg7[%c0_17, %c0_18, %c0_19], %34 {strides = array<i32>} : memref<1x8x16xf32, #tpu.memory_space<vmem>>, vector<1x8x16xf32>,
    return
  }
  func.func @transform_0(%arg0: i32, %arg1: i32) -> (i32, i32, i32) {
    %c0_i32 = arith.constant 0 : i32
    %c0_i32_0 = arith.constant 0 : i32
    return %arg0, %arg1, %c0_i32 : i32, i32, i32
  }
  func.func @transform_1(%arg0: i32, %arg1: i32) -> (i32, i32, i32) {
    %c0_i32 = arith.constant 0 : i32
    %c0_i32_0 = arith.constant 0 : i32
    %c0_i32_1 = arith.constant 0 : i32
    return %arg0, %c0_i32, %c0_i32_0 : i32, i32, i32
  }
  func.func @transform_2(%arg0: i32, %arg1: i32) -> (i32, i32, i32) {
    %c0_i32 = arith.constant 0 : i32
    %c0_i32_0 = arith.constant 0 : i32
    %c0_i32_1 = arith.constant 0 : i32
    return %arg0, %c0_i32, %c0_i32_0 : i32, i32, i32
  }
  func.func @transform_3(%arg0: i32, %arg1: i32) -> (i32, i32) {
    %c0_i32 = arith.constant 0 : i32
    %c0_i32_0 = arith.constant 0 : i32
    %c0_i32_1 = arith.constant 0 : i32
    return %c0_i32, %c0_i32_0 : i32, i32
  }
  func.func @transform_4(%arg0: i32, %arg1: i32) -> (i32, i32) {
    %c0_i32 = arith.constant 0 : i32
    %c0_i32_0 = arith.constant 0 : i32
    %c0_i32_1 = arith.constant 0 : i32
    return %c0_i32, %c0_i32_0 : i32, i32
  }
  func.func @transform_5(%arg0: i32, %arg1: i32) -> (i32, i32, i32) {
    %c0_i32 = arith.constant 0 : i32
    %c0_i32_0 = arith.constant 0 : i32
    return %arg0, %arg1, %c0_i32 : i32, i32, i32
  }
}

</mosaic_0001>

<llo_original>
// kernel: _lambda_.1
$region0: #{_lambda_.1}
  #allocation0 [shape = 'u32[]', space=smem, size = 0x4, offset = 0x4, fixed_abs, tag = 'smem constant byte address 0x4 - core index']
  #allocation1 [shape = 'u32[72,128]{1,0:T(1,128)}', space=vmem, size = 0x9000, scoped, tag = 'internal scratch']
  %s0 = inlined_call_operand.vmem [shape: f32[2,8,32], index: 0, kind: input, shape index: {}]
  %s1 = inlined_call_operand.vmem [shape: f32[2,1,32], index: 1, kind: input, shape index: {}]
  %s2 = inlined_call_operand.vmem [shape: f32[2,1,32], index: 2, kind: input, shape index: {}]
  %s3 = inlined_call_operand.vmem [shape: f32[32,128], index: 3, kind: input, shape index: {}]
  %s4 = inlined_call_operand.vmem [shape: f32[1,128], index: 4, kind: input, shape index: {}]
  %s5 = inlined_call_operand.hbm [shape: f32[2,8,16], index: 5, kind: output, shape index: {}]
  %s6 = sld [smem:[#allocation0]]
  $region53: #{_lambda_.1} parent=0
    _
  %s8 = ssub.s32 1, %s6
  %s9 = scalar_select 0, %s8, %s6
  $region1: #{_lambda_.1} parent=0
    #allocation2 [shape = 'u8[8192]{0}', space=vmem, size = 0x2000, scoped, tag = 'output window, operand 0']
    #allocation3 [shape = 's32[2]{0}', space=sflag, size = 0x8, scoped, tag = 'scoped memory for _lambda_.1']
    %10 = vsyncpa [#allocation3], 0
    %s11 = scalar_lea.sflag [#allocation3], 1
    %12 = vsyncpa %s11, 0
    loop: start=0, step=1, limit=4
    $region2: #{_lambda_.1} parent=1 // loop_pre_header
      _
    $region3: #{_lambda_.1} parent=1 // loop_header
      %s14 = sphi 0, %s18
      %p15 = scmp.ge.s32.totalorder %s14, 4
      %s21 = sphi 0, %s33
      %s22 = sphi 0, %s29
      %s23 = sphi 0, %s21
      %s24 = sphi 0, %s22
      %s25 = sphi 0, %s23
      %s26 = sphi 0, %s24
      %s38 = sphi 0, %s40
      %s41 = sphi 0, %s38
      %s42 = sphi 0, %s41
      %s58 = sphi 0, %s42
      %s64 = sphi 0, %s66
      %s67 = sphi 0, %s64
      %s68 = sphi 0, %s67
      %s84 = sphi 0, %s68
      %s90 = sphi 0, %s92
      %s93 = sphi 0, %s90
      %s94 = sphi 0, %s93
      %s110 = sphi 0, %s94
      %s114 = sphi 0, %s114
      %s116 = sphi 0, %s114
      %s117 = sphi 0, %s116
      %s131 = sphi 0, %s117
      %s135 = sphi 0, %s135
      %s137 = sphi 0, %s135
      %s138 = sphi 0, %s137
      %s152 = sphi 0, %s138
      %s160 = sphi 0, %s162
      %s163 = sphi 0, %s160
      %s164 = sphi 0, %s163
      %s180 = sphi 0, %s164
    $region4: #{_lambda_.1} parent=1 // loop_header_branch
      %17 = sbr.rel (%p15) target = $region8
    $region5: #{_lambda_.1} parent=1 // loop_body
      %s19 = ssub.s32 %s14, 1
      %s20 = ssub.s32 %s14, 2
      %s27 = sadd.s32 1, %s22
      %p28 = scmp.ge.s32.totalorder %s27, 1
      %s29 = scalar_select %p28, 0, %s27
      %s30 = sadd.s32 1, %s21
      %s31 = scalar_select %p28, %s30, %s21
      %p32 = scmp.ge.s32.totalorder %s31, 2
      %s33 = scalar_select %p32, 0, %s31
      %s34 = ssub.s32 %s21, %s33
      %s35 = ssub.s32 %s22, %s29
      %s36 = sor.u32 %s34, %s35
      %p37 = scmp.eq.s32.totalorder %s36, 0
      %s39 = sadd.s32 %s38, 1
      %s40 = scalar_select %p37, %s38, %s39
      %p43 = pneg %p37
      %p44 = scmp.eq.s32.totalorder %s14, 1
      %p45 = por %p43, %p44
      %p46 = scmp.ne.s32.totalorder %s38, %s41
      %p47 = scmp.eq.s32.totalorder %s14, 0
      %p48 = por %p46, %p47
      %p49 = scmp.ne.s32.totalorder %s38, %s41
      %p50 = scmp.eq.s32.totalorder %s19, 1
      %p51 = por %p49, %p50
      %p52 = scmp.ne.s32.totalorder %s41, %s42
      %p53 = scmp.eq.s32.totalorder %s19, 0
      %p54 = por %p52, %p53
      %p55 = scmp.ne.s32.totalorder %s41, %s42
      %p56 = scmp.eq.s32.totalorder %s20, 1
      %p57 = por %p55, %p56
      %p59 = scmp.ne.s32.totalorder %s42, %s58
      %p60 = scmp.eq.s32.totalorder %s20, 0
      %p61 = por %p59, %p60
      %s62 = ssub.s32 %s21, %s33
      %p63 = scmp.eq.s32.totalorder %s62, 0
      %s65 = sadd.s32 %s64, 1
      %s66 = scalar_select %p63, %s64, %s65
      %p69 = pneg %p63
      %p70 = scmp.eq.s32.totalorder %s14, 1
      %p71 = por %p69, %p70
      %p72 = scmp.ne.s32.totalorder %s64, %s67
      %p73 = scmp.eq.s32.totalorder %s14, 0
      %p74 = por %p72, %p73
      %p75 = scmp.ne.s32.totalorder %s64, %s67
      %p76 = scmp.eq.s32.totalorder %s19, 1
      %p77 = por %p75, %p76
      %p78 = scmp.ne.s32.totalorder %s67, %s68
      %p79 = scmp.eq.s32.totalorder %s19, 0
      %p80 = por %p78, %p79
      %p81 = scmp.ne.s32.totalorder %s67, %s68
      %p82 = scmp.eq.s32.totalorder %s20, 1
      %p83 = por %p81, %p82
      %p85 = scmp.ne.s32.totalorder %s68, %s84
      %p86 = scmp.eq.s32.totalorder %s20, 0
      %p87 = por %p85, %p86
      %s88 = ssub.s32 %s21, %s33
      %p89 = scmp.eq.s32.totalorder %s88, 0
      %s91 = sadd.s32 %s90, 1
      %s92 = scalar_select %p89, %s90, %s91
      %p95 = pneg %p89
      %p96 = scmp.eq.s32.totalorder %s14, 1
      %p97 = por %p95, %p96
      %p98 = scmp.ne.s32.totalorder %s90, %s93
      %p99 = scmp.eq.s32.totalorder %s14, 0
      %p100 = por %p98, %p99
      %p101 = scmp.ne.s32.totalorder %s90, %s93
      %p102 = scmp.eq.s32.totalorder %s19, 1
      %p103 = por %p101, %p102
      %p104 = scmp.ne.s32.totalorder %s93, %s94
      %p105 = scmp.eq.s32.totalorder %s19, 0
      %p106 = por %p104, %p105
      %p107 = scmp.ne.s32.totalorder %s93, %s94
      %p108 = scmp.eq.s32.totalorder %s20, 1
      %p109 = por %p107, %p108
      %p111 = scmp.ne.s32.totalorder %s94, %s110
      %p112 = scmp.eq.s32.totalorder %s20, 0
      %p113 = por %p111, %p112
      %s115 = sadd.s32 %s114, 1
      %p118 = scmp.eq.s32.totalorder %s14, 1
      %p119 = scmp.ne.s32.totalorder %s114, %s116
      %p120 = scmp.eq.s32.totalorder %s14, 0
      %p121 = por %p119, %p120
      %p122 = scmp.ne.s32.totalorder %s114, %s116
      %p123 = scmp.eq.s32.totalorder %s19, 1
      %p124 = por %p122, %p123
      %p125 = scmp.ne.s32.totalorder %s116, %s117
      %p126 = scmp.eq.s32.totalorder %s19, 0
      %p127 = por %p125, %p126
      %p128 = scmp.ne.s32.totalorder %s116, %s117
      %p129 = scmp.eq.s32.totalorder %s20, 1
      %p130 = por %p128, %p129
      %p132 = scmp.ne.s32.totalorder %s117, %s131
      %p133 = scmp.eq.s32.totalorder %s20, 0
      %p134 = por %p132, %p133
      %s136 = sadd.s32 %s135, 1
      %p139 = scmp.eq.s32.totalorder %s14, 1
      %p140 = scmp.ne.s32.totalorder %s135, %s137
      %p141 = scmp.eq.s32.totalorder %s14, 0
      %p142 = por %p140, %p141
      %p143 = scmp.ne.s32.totalorder %s135, %s137
      %p144 = scmp.eq.s32.totalorder %s19, 1
      %p145 = por %p143, %p144
      %p146 = scmp.ne.s32.totalorder %s137, %s138
      %p147 = scmp.eq.s32.totalorder %s19, 0
      %p148 = por %p146, %p147
      %p149 = scmp.ne.s32.totalorder %s137, %s138
      %p150 = scmp.eq.s32.totalorder %s20, 1
      %p151 = por %p149, %p150
      %p153 = scmp.ne.s32.totalorder %s138, %s152
      %p154 = scmp.eq.s32.totalorder %s20, 0
      %p155 = por %p153, %p154
      %s156 = ssub.s32 %s21, %s33
      %s157 = ssub.s32 %s22, %s29
      %s158 = sor.u32 %s156, %s157
      %p159 = scmp.eq.s32.totalorder %s158, 0
      %s161 = sadd.s32 %s160, 1
      %s162 = scalar_select %p159, %s160, %s161
      %p165 = pneg %p159
      %p166 = scmp.eq.s32.totalorder %s14, 1
      %p167 = por %p165, %p166
      %p168 = scmp.ne.s32.totalorder %s160, %s163
      %p169 = scmp.eq.s32.totalorder %s14, 0
      %p170 = por %p168, %p169
      %p171 = scmp.ne.s32.totalorder %s160, %s163
      %p172 = scmp.eq.s32.totalorder %s19, 1
      %p173 = por %p171, %p172
      %p174 = scmp.ne.s32.totalorder %s163, %s164
      %p175 = scmp.eq.s32.totalorder %s19, 0
      %p176 = por %p174, %p175
      %p177 = scmp.ne.s32.totalorder %s163, %s164
      %p178 = scmp.eq.s32.totalorder %s20, 1
      %p179 = por %p177, %p178
      %p181 = scmp.ne.s32.totalorder %s164, %s180
      %p182 = scmp.eq.s32.totalorder %s20, 0
      %p183 = por %p181, %p182
      %p184 = scmp.le.s32.totalorder 1, %s14
      %p185 = scmp.lt.s32.totalorder %s14, 3
      %p186 = pnand %p184, %p185
      %p187 = pneg %p186
      // Predicated region
      $region9: #{_lambda_.1} parent=5 // pred_check
        _
      $region10: #{_lambda_.1} parent=5 // pred_check_branch
        %189 = sbr.rel (%p186) target = $region12
      $region11: #{_lambda_.1} parent=5 // pred_region
        %s190 = ssub.s32 %s14, 1
        // Predicated region
        $region13: #{_lambda_.1} parent=11 // pred_check
          %p191 = pneg %p127
        $region14: #{_lambda_.1} parent=11 // pred_check_branch
          %193 = sbr.rel (%p191) target = $region16
        $region15: #{_lambda_.1} parent=11 // pred_region
          _
        $region16: #{_lambda_.1} parent=11 // pred_fallthru
          _
        // Predicated region
        $region17: #{_lambda_.1} parent=11 // pred_check
          %p194 = pneg %p148
        $region18: #{_lambda_.1} parent=11 // pred_check_branch
          %196 = sbr.rel (%p194) target = $region20
        $region19: #{_lambda_.1} parent=11 // pred_region
          _
        $region20: #{_lambda_.1} parent=11 // pred_fallthru
          _
      $region12: #{_lambda_.1} parent=5 // pred_fallthru
        _
      %p197 = scmp.lt.s32.totalorder %s14, 2
      // Predicated region
      $region21: #{_lambda_.1} parent=5 // pred_check
        %p198 = pneg %p197
      $region22: #{_lambda_.1} parent=5 // pred_check_branch
        %200 = sbr.rel (%p198) target = $region24
      $region23: #{_lambda_.1} parent=5 // pred_region
        // Predicated region
        $region25: #{_lambda_.1} parent=23 // pred_check
          %p201 = pneg %p48
        $region26: #{_lambda_.1} parent=23 // pred_check_branch
          %203 = sbr.rel (%p201) target = $region28
        $region27: #{_lambda_.1} parent=23 // pred_region
          %p204 = scmp.lt.s32.totalorder %s21, 1
          %s205 = scalar_select %p204, %s21, 1
          %p206 = scmp.lt.s32.totalorder %s22, 0
          %s207 = scalar_select %p206, %s22, 0
          %s208 = sadd.s32 %s207, %s205
          %s209 = smul.addr %s208, 8
          %s210 = scalar_lea.vmem %s0, %s209
        $region28: #{_lambda_.1} parent=23 // pred_fallthru
          _
        // Predicated region
        $region29: #{_lambda_.1} parent=23 // pred_check
          %p211 = pneg %p74
        $region30: #{_lambda_.1} parent=23 // pred_check_branch
          %213 = sbr.rel (%p211) target = $region32
        $region31: #{_lambda_.1} parent=23 // pred_region
          %p214 = scmp.lt.s32.totalorder %s21, 1
          %s215 = scalar_select %p214, %s21, 1
          %s216 = scalar_lea.vmem %s1, %s215
        $region32: #{_lambda_.1} parent=23 // pred_fallthru
          _
        // Predicated region
        $region33: #{_lambda_.1} parent=23 // pred_check
          %p217 = pneg %p100
        $region34: #{_lambda_.1} parent=23 // pred_check_branch
          %219 = sbr.rel (%p217) target = $region36
        $region35: #{_lambda_.1} parent=23 // pred_region
          %p220 = scmp.lt.s32.totalorder %s21, 1
          %s221 = scalar_select %p220, %s21, 1
          %s222 = scalar_lea.vmem %s2, %s221
        $region36: #{_lambda_.1} parent=23 // pred_fallthru
          _
      $region24: #{_lambda_.1} parent=5 // pred_fallthru
        _
      %p223 = scmp.le.s32.totalorder 1, %s14
      %p224 = scmp.lt.s32.totalorder %s14, 3
      %p225 = pnand %p223, %p224
      %p226 = pneg %p225
      // Predicated region
      $region37: #{_lambda_.1} parent=5 // pred_check
        _
      $region38: #{_lambda_.1} parent=5 // pred_check_branch
        %228 = sbr.rel (%p225) target = $region40
      $region39: #{_lambda_.1} parent=5 // pred_region
        %s229 = ssub.s32 %s14, 1
        %p230 = scmp.lt.s32.totalorder %s23, 1
        %s231 = scalar_select %p230, %s23, 1
        %p232 = scmp.lt.s32.totalorder %s24, 0
        %s233 = scalar_select %p232, %s24, 0
        %s234 = sadd.s32 %s233, %s231
        %s235 = smul.addr %s234, 8
        %s236 = scalar_lea.vmem %s0, %s235
        %p237 = pneg %p54
        %p238 = pneg %p51
        %p239 = scmp.lt.s32.totalorder %s23, 1
        %s240 = scalar_select %p239, %s23, 1
        %s241 = scalar_lea.vmem %s1, %s240
        %p242 = pneg %p80
        %p243 = pneg %p77
        %p244 = scmp.lt.s32.totalorder %s23, 1
        %s245 = scalar_select %p244, %s23, 1
        %s246 = scalar_lea.vmem %s2, %s245
        %p247 = pneg %p106
        %p248 = pneg %p103
        %p249 = pneg %p127
        %p250 = pneg %p124
        %p251 = pneg %p148
        %p252 = pneg %p145
        %p253 = pneg %p176
        %p254 = pneg %p173
        %s255 = sand.u32 %s163, 1
        %s256 = scalar_lea.sflag [#allocation3], %s255
        %s257 = sand.u32 %s163, 1
        %s258 = smul.addr %s257, 8
        %s259 = scalar_lea.vmem [#allocation2], %s258
        %p260 = scmp.lt.s32.totalorder %s23, 1
        %s261 = scalar_select %p260, %s23, 1
        %p262 = scmp.lt.s32.totalorder %s24, 0
        %s263 = scalar_select %p262, %s24, 0
        %s264 = sadd.s32 %s263, %s261
        %s265 = smul.addr %s264, 8
        %s266 = scalar_lea.vmem %s0, %s265
        %p267 = scmp.lt.s32.totalorder %s23, 1
        %s268 = scalar_select %p267, %s23, 1
        %s269 = scalar_lea.vmem %s1, %s268
        %p270 = scmp.lt.s32.totalorder %s23, 1
        %s271 = scalar_select %p270, %s23, 1
        %s272 = scalar_lea.vmem %s2, %s271
        %v273 = vld [vmem:[%s266] sm:$0xff]
        %vm274 = vcmask 261120
        %v275 = vsel %vm274, %v273, 0.0
        %276 = vadd.xlane.f32.xlu0 %v275
        %v277 = vpop.xlane.xlu0 %276
        %v278 = vrcp.pop 32.0
        %v279 = vmul.f32 32.0, %v278
        %v280 = vsub.f32 1.0, %v279
        %v281 = vmul.f32 %v278, %v280
        %v282 = vadd.f32 %v278, %v281
        %vm283 = vweird.f32 %v278
        %v284 = vsel %vm283, %v278, %v282
        %v285 = vmul.f32 %v277, %v284
        %v286 = vsub.f32 %v273, %v285
        %v287 = vmul.f32 %v286, %v286
        %v288 = vsel %vm274, %v287, 0.0
        %289 = vadd.xlane.f32.xlu0 %v288
        %v290 = vpop.xlane.xlu0 %289
        %v291 = vmul.f32 %v290, %v284
        %v292 = vadd.f32 %v291, 1e-05
        %v293 = vrsqrt.pop %v292
        %v294 = vmul.f32 %v293, %v292
        %v295 = vmul.f32 %v294, %v293
        %v296 = vmul.f32 0.5, %v295
        %v297 = vsub.f32 1.5, %v296
        %v298 = vmul.f32 %v293, %v297
        %vm299 = vweird.f32 %v292
        %vm300 = vweird.f32 %v293
        %vm301 = vmor %vm299, %vm300
        %v302 = vsel %vm301, %v293, %v298
        %v303 = vld [vmem:[%s272] sm:$0x1]
        %v305 = vperm.slane %v303, 0
        %v307 = vmul.f32 %v302, %v305
        %v308 = vmul.f32 %v286, %v307
        %v309 = vld [vmem:[%s269] sm:$0x1]
        %v311 = vperm.slane %v309, 0
        %v313 = vadd.f32 %v308, %v311
        %v314 = vld [vmem:[%s3] sm:$0xff]
        %v315 = vld [vmem:[%s3 + $0x8] sm:$0xff]
        %v316 = vld [vmem:[%s3 + $0x10] sm:$0xff]
        %v317 = vld [vmem:[%s3 + $0x18] sm:$0xff]
        %v318 = vld [vmem:[%s4] sm:$0x1]
        %v320 = vperm.slane %v318, 0
        %v323 = vsel %vm274, %v313, 0
        %325 = vmatpush.msra.mxu0 0.0
        %326 = vmatpush.msra.mxu0 0.0
        %327 = vmatpush.msra.mxu0 0.0
        %328 = vmatpush.msra.mxu0 0.0
        %329 = vmatpush.msra.mxu0 0.0
        %330 = vmatpush.msra.mxu0 0.0
        %331 = vmatpush.msra.mxu0 0.0
        %332 = vmatpush.msra.mxu0 0.0
        %333 = vmatpush.msra.mxu0 0.0
        %334 = vmatpush.msra.mxu0 0.0
        %335 = vmatpush.msra.mxu0 0.0
        %336 = vmatpush.msra.mxu0 0.0
        %v337 = vand.u32 %v317, 4294901760
        %338 = vmatpush.msra.mxu0 %v337
        %v339 = vand.u32 %v316, 4294901760
        %340 = vmatpush.msra.mxu0 %v339
        %v341 = vand.u32 %v315, 4294901760
        %342 = vmatpush.msra.mxu0 %v341
        %v343 = vand.u32 %v314, 4294901760
        %344 = vmatpush.msra.mxu0 %v343
        %v345 = vand.u32 %v323, 4294901760
        %v346 = vsub.f32 %v323, %v345
        %v347 = vand.u32 %v346, 4294901760
        %v348 = vsub.f32 %v346, %v347
        %v349 = vand.u32 %v348, 4294901760
        %350 = vmatmul.f32.gmra.mxu0 %v349
        %v351 = vpop.f32.mrf.mxu0
        %v352 = vadd.f32 %v320, %v351
        %353 = vdwg.mxu0
        %354 = vmatpush.msra.mxu0 0.0
        %355 = vmatpush.msra.mxu0 0.0
        %356 = vmatpush.msra.mxu0 0.0
        %357 = vmatpush.msra.mxu0 0.0
        %358 = vmatpush.msra.mxu0 0.0
        %359 = vmatpush.msra.mxu0 0.0
        %360 = vmatpush.msra.mxu0 0.0
        %361 = vmatpush.msra.mxu0 0.0
        %362 = vmatpush.msra.mxu0 0.0
        %363 = vmatpush.msra.mxu0 0.0
        %364 = vmatpush.msra.mxu0 0.0
        %365 = vmatpush.msra.mxu0 0.0
        %v366 = vand.u32 %v317, 4294901760
        %v367 = vsub.f32 %v317, %v366
        %v368 = vand.u32 %v367, 4294901760
        %v369 = vsub.f32 %v367, %v368
        %v370 = vand.u32 %v369, 4294901760
        %371 = vmatpush.msra.mxu0 %v370
        %v372 = vand.u32 %v316, 4294901760
        %v373 = vsub.f32 %v316, %v372
        %v374 = vand.u32 %v373, 4294901760
        %v375 = vsub.f32 %v373, %v374
        %v376 = vand.u32 %v375, 4294901760
        %377 = vmatpush.msra.mxu0 %v376
        %v378 = vand.u32 %v315, 4294901760
        %v379 = vsub.f32 %v315, %v378
        %v380 = vand.u32 %v379, 4294901760
        %v381 = vsub.f32 %v379, %v380
        %v382 = vand.u32 %v381, 4294901760
        %383 = vmatpush.msra.mxu0 %v382
        %v384 = vand.u32 %v314, 4294901760
        %v385 = vsub.f32 %v314, %v384
        %v386 = vand.u32 %v385, 4294901760
        %v387 = vsub.f32 %v385, %v386
        %v388 = vand.u32 %v387, 4294901760
        %389 = vmatpush.msra.mxu0 %v388
        %v390 = vand.u32 %v323, 4294901760
        %391 = vmatmul.f32.gmra.mxu0 %v390
        %v392 = vpop.f32.mrf.mxu0
        %v393 = vadd.f32 %v352, %v392
        %394 = vdwg.mxu0
        %395 = vmatpush.msra.mxu0 0.0
        %396 = vmatpush.msra.mxu0 0.0
        %397 = vmatpush.msra.mxu0 0.0
        %398 = vmatpush.msra.mxu0 0.0
        %399 = vmatpush.msra.mxu0 0.0
        %400 = vmatpush.msra.mxu0 0.0
        %401 = vmatpush.msra.mxu0 0.0
        %402 = vmatpush.msra.mxu0 0.0
        %403 = vmatpush.msra.mxu0 0.0
        %404 = vmatpush.msra.mxu0 0.0
        %405 = vmatpush.msra.mxu0 0.0
        %406 = vmatpush.msra.mxu0 0.0
        %v407 = vand.u32 %v317, 4294901760
        %v408 = vsub.f32 %v317, %v407
        %409 = vmatpush.msra.mxu0 %v408
        %v410 = vand.u32 %v316, 4294901760
        %v411 = vsub.f32 %v316, %v410
        %412 = vmatpush.msra.mxu0 %v411
        %v413 = vand.u32 %v315, 4294901760
        %v414 = vsub.f32 %v315, %v413
        %415 = vmatpush.msra.mxu0 %v414
        %v416 = vand.u32 %v314, 4294901760
        %v417 = vsub.f32 %v314, %v416
        %418 = vmatpush.msra.mxu0 %v417
        %v419 = vand.u32 %v323, 4294901760
        %v420 = vsub.f32 %v323, %v419
        %421 = vmatmul.f32.gmra.mxu0 %v420
        %v422 = vpop.f32.mrf.mxu0
        %v423 = vadd.f32 %v393, %v422
        %424 = vdwg.mxu0
        %425 = vmatpush.msra.mxu0 0.0
        %426 = vmatpush.msra.mxu0 0.0
        %427 = vmatpush.msra.mxu0 0.0
        %428 = vmatpush.msra.mxu0 0.0
        %429 = vmatpush.msra.mxu0 0.0
        %430 = vmatpush.msra.mxu0 0.0
        %431 = vmatpush.msra.mxu0 0.0
        %432 = vmatpush.msra.mxu0 0.0
        %433 = vmatpush.msra.mxu0 0.0
        %434 = vmatpush.msra.mxu0 0.0
        %435 = vmatpush.msra.mxu0 0.0
        %436 = vmatpush.msra.mxu0 0.0
        %v437 = vand.u32 %v317, 4294901760
        %438 = vmatpush.msra.mxu0 %v437
        %v439 = vand.u32 %v316, 4294901760
        %440 = vmatpush.msra.mxu0 %v439
        %v441 = vand.u32 %v315, 4294901760
        %442 = vmatpush.msra.mxu0 %v441
        %v443 = vand.u32 %v314, 4294901760
        %444 = vmatpush.msra.mxu0 %v443
        %v445 = vand.u32 %v323, 4294901760
        %v446 = vsub.f32 %v323, %v445
        %v447 = vand.u32 %v446, 4294901760
        %448 = vmatmul.f32.gmra.mxu0 %v447
        %v449 = vpop.f32.mrf.mxu0
        %v450 = vadd.f32 %v423, %v449
        %451 = vdwg.mxu0
        %452 = vmatpush.msra.mxu0 0.0
        %453 = vmatpush.msra.mxu0 0.0
        %454 = vmatpush.msra.mxu0 0.0
        %455 = vmatpush.msra.mxu0 0.0
        %456 = vmatpush.msra.mxu0 0.0
        %457 = vmatpush.msra.mxu0 0.0
        %458 = vmatpush.msra.mxu0 0.0
        %459 = vmatpush.msra.mxu0 0.0
        %460 = vmatpush.msra.mxu0 0.0
        %461 = vmatpush.msra.mxu0 0.0
        %462 = vmatpush.msra.mxu0 0.0
        %463 = vmatpush.msra.mxu0 0.0
        %v464 = vand.u32 %v317, 4294901760
        %v465 = vsub.f32 %v317, %v464
        %v466 = vand.u32 %v465, 4294901760
        %467 = vmatpush.msra.mxu0 %v466
        %v468 = vand.u32 %v316, 4294901760
        %v469 = vsub.f32 %v316, %v468
        %v470 = vand.u32 %v469, 4294901760
        %471 = vmatpush.msra.mxu0 %v470
        %v472 = vand.u32 %v315, 4294901760
        %v473 = vsub.f32 %v315, %v472
        %v474 = vand.u32 %v473, 4294901760
        %475 = vmatpush.msra.mxu0 %v474
        %v476 = vand.u32 %v314, 4294901760
        %v477 = vsub.f32 %v314, %v476
        %v478 = vand.u32 %v477, 4294901760
        %479 = vmatpush.msra.mxu0 %v478
        %v480 = vand.u32 %v323, 4294901760
        %481 = vmatmul.f32.gmra.mxu0 %v480
        %v482 = vpop.f32.mrf.mxu0
        %v483 = vadd.f32 %v450, %v482
        %484 = vdwg.mxu0
        %485 = vmatpush.msra.mxu0 0.0
        %486 = vmatpush.msra.mxu0 0.0
        %487 = vmatpush.msra.mxu0 0.0
        %488 = vmatpush.msra.mxu0 0.0
        %489 = vmatpush.msra.mxu0 0.0
        %490 = vmatpush.msra.mxu0 0.0
        %491 = vmatpush.msra.mxu0 0.0
        %492 = vmatpush.msra.mxu0 0.0
        %493 = vmatpush.msra.mxu0 0.0
        %494 = vmatpush.msra.mxu0 0.0
        %495 = vmatpush.msra.mxu0 0.0
        %496 = vmatpush.msra.mxu0 0.0
        %v497 = vand.u32 %v317, 4294901760
        %498 = vmatpush.msra.mxu0 %v497
        %v499 = vand.u32 %v316, 4294901760
        %500 = vmatpush.msra.mxu0 %v499
        %v501 = vand.u32 %v315, 4294901760
        %502 = vmatpush.msra.mxu0 %v501
        %v503 = vand.u32 %v314, 4294901760
        %504 = vmatpush.msra.mxu0 %v503
        %v505 = vand.u32 %v323, 4294901760
        %506 = vmatmul.f32.gmra.mxu0 %v505
        %v507 = vpop.f32.mrf.mxu0
        %v508 = vadd.f32 %v483, %v507
        %509 = vdwg.mxu0
        %vm510 = vcmask 130048
        %511 = vst.msk [vmem:[%s259] sm:$0xff] %vm510, %v508
        %s512 = sand.u32 %s163, 1
        %s513 = scalar_lea.sflag [#allocation3], %s512
        %s514 = sand.u32 %s163, 1
        %s515 = smul.addr %s514, 8
        %s516 = scalar_lea.vmem [#allocation2], %s515
        // Predicated region
        $region41: #{_lambda_.1} parent=39 // pred_check
          %p517 = pneg %p173
        $region42: #{_lambda_.1} parent=39 // pred_check_branch
          %519 = sbr.rel (%p517) target = $region44
        $region43: #{_lambda_.1} parent=39 // pred_region
          %521 = vsyncadd %s513, 0
          %s522 = sadd.s32 %s24, %s23
          %s523 = smul.addr %s522, 8
          %s524 = scalar_lea.hbm %s5, %s523
          %s526 = sshll.u32 %s516, 4
          %s527 = int_to_ptr.vmem [resolvable:$true] %s526
          %s528 = sshll.u32 %s524, 4
          %s529 = int_to_ptr.hbm [resolvable:$true] %s528
          %531 = dma.vmem_to_hbm [thread:$0]  %s527, 128, %s529, %s513
        $region44: #{_lambda_.1} parent=39 // pred_fallthru
          _
      $region40: #{_lambda_.1} parent=5 // pred_fallthru
        _
      %p532 = scmp.le.s32.totalorder 2, %s14
      // Predicated region
      $region45: #{_lambda_.1} parent=5 // pred_check
        %p533 = pneg %p532
      $region46: #{_lambda_.1} parent=5 // pred_check_branch
        %535 = sbr.rel (%p533) target = $region48
      $region47: #{_lambda_.1} parent=5 // pred_region
        %s536 = ssub.s32 %s14, 2
        // Predicated region
        $region49: #{_lambda_.1} parent=47 // pred_check
          %p537 = pneg %p179
        $region50: #{_lambda_.1} parent=47 // pred_check_branch
          %539 = sbr.rel (%p537) target = $region52
        $region51: #{_lambda_.1} parent=47 // pred_region
          %s540 = sand.u32 %s164, 1
          %s541 = scalar_lea.sflag [#allocation3], %s540
          %s542 = sand.u32 %s164, 1
          %s543 = smul.addr %s542, 8
          %s544 = scalar_lea.vmem [#allocation2], %s543
          %546 = dma.done %s541, 128
        $region52: #{_lambda_.1} parent=47 // pred_fallthru
          _
      $region48: #{_lambda_.1} parent=5 // pred_fallthru
        _
    $region6: #{_lambda_.1} parent=1 // loop_footer
      %s18 = sadd.s32 1, %s14
    $region7: #{_lambda_.1} parent=1 // loop_footer_branch
      %13 = sbr.rel target = $region3
    $region8: #{_lambda_.1} parent=1 // loop_exit
      _
    %547 = vsyncpa [#allocation3], 1
    %s548 = scalar_lea.sflag [#allocation3], 1
    %549 = vsyncpa %s548, 1

</llo_original>
